<compile_context>
chip_gen: v6e
topology: v6e:2x2x1
jax: 0.10.0
libtpu: 0.0.40
codegen_flags: <defaults>
</compile_context>

<pallas_src>
import functools

import jax
import jax.numpy as jnp
from jax.experimental import pallas as pl
from jax.experimental.pallas import tpu as pltpu


def _mlp_kernel(params_ref, x_ref, o_ref, *, n_hidden):
    """Fused 1 -> H -> 1 MLP forward on a dense (block_rows, 128) batch tile.

    params_ref : SMEM (3*H + 1,) f32   -- [w1 (H) | b1 (H) | w2 (H) | b2 (1)]
    x_ref      : VMEM (block_rows, 128) f32 -- batch, lane+sublane dense
    o_ref      : VMEM (block_rows, 128) f32
    """
    x = x_ref[...]                                          # (TR, 128)
    # Start the accumulator at the output bias (saves one broadcast add).
    acc = jnp.full_like(x, params_ref[3 * n_hidden])
    # Unrolled over the hidden units with scalar params from SMEM:
    # 5 VALU ops per hidden unit per vreg; no MXU (K=1/N=1 matmuls lose on
    # push cadence), no cross-lane/XLU traffic, unmasked full-vreg stores.
    for h in range(n_hidden):
        w1h = params_ref[h]
        b1h = params_ref[n_hidden + h]
        w2h = params_ref[2 * n_hidden + h]
        acc = acc + w2h * jnp.maximum(w1h * x + b1h, 0.0)
    o_ref[...] = acc.astype(o_ref.dtype)


def net_forward(x, w1, b1, w2, b2, *, block_rows=1024):
    """Forward pass of `Net`.

    x : (N, 1) float32   (PyTorch layout after torch.unsqueeze(x, dim=1))
    w1: (1, H), b1: (1, H)   -- hidden layer (stored as (in, out))
    w2: (H, 1), b2: (1, 1)   -- predict layer
    Returns (N, 1) float32.
    """
    n, f = x.shape
    hidden = w1.shape[1]
    n_out = w2.shape[1]
    assert f == 1 and n_out == 1, (
        "kernel is specialized for the regression Net (n_feature=1, n_output=1)")
    assert block_rows % 8 == 0

    # Batch -> (rows, 128): lanes AND sublanes dense.  Only pad up to the next
    # multiple of 128; if N is already aligned this is a free reshape.
    lanes = 128
    rows = pl.cdiv(n, lanes)
    xf = x.reshape(-1).astype(jnp.float32)
    if rows * lanes != n:
        xf = jnp.pad(xf, (0, rows * lanes - n))
    x2d = xf.reshape(rows, lanes)

    # Single tile if it fits, else block_rows-row tiles (multiple of 8).
    # Pallas handles a partial last tile (padded reads, OOB writes dropped).
    tr = rows if rows <= block_rows else block_rows
    grid = (pl.cdiv(rows, tr),)

    # All 3*H + 1 parameters packed on the scalar path (one tiny SMEM array).
    params = jnp.concatenate([
        jnp.asarray(w1, jnp.float32).reshape(-1),
        jnp.asarray(b1, jnp.float32).reshape(-1),
        jnp.asarray(w2, jnp.float32).reshape(-1),
        jnp.asarray(b2, jnp.float32).reshape(-1),
    ])

    out2d = pl.pallas_call(
        functools.partial(_mlp_kernel, n_hidden=hidden),
        out_shape=jax.ShapeDtypeStruct((rows, lanes), jnp.float32),
        grid=grid,
        in_specs=[
            pl.BlockSpec(memory_space=pltpu.MemorySpace.SMEM),   # packed params
            pl.BlockSpec((tr, lanes), lambda i: (i, 0)),         # x tile
        ],
        out_specs=pl.BlockSpec((tr, lanes), lambda i: (i, 0)),   # dense output
        compiler_params=pltpu.CompilerParams(
            dimension_semantics=("parallel",)),   # shards across v7x's 2 TCs
    )(params, x2d)

    return out2d.reshape(-1)[:n].reshape(n, 1)


def _reference(x, w1, b1, w2, b2):
    return jnp.maximum(x @ w1 + b1, 0.0) @ w2 + b2


if __name__ == "__main__":
    # Shapes implied by the regression script: x unsqueezed to (N, 1),
    # n_hidden = 32, n_output = 1.
    n_feature, n_hidden, n_output = 1, 32, 1

    key = jax.random.PRNGKey(0)
    kx, k1, kb1, k2, kb2, kx2, kx3 = jax.random.split(key, 7)

    # (in, out) layout — identical math to PyTorch's x @ W.T + b.
    w1 = jax.random.normal(k1, (n_feature, n_hidden), dtype=jnp.float32) * 0.1
    b1 = jax.random.normal(kb1, (1, n_hidden), dtype=jnp.float32) * 0.1
    w2 = jax.random.normal(k2, (n_hidden, n_output), dtype=jnp.float32) * 0.1
    b2 = jax.random.normal(kb2, (1, n_output), dtype=jnp.float32) * 0.1

    # Small batch: pads 8 -> 128, single (1, 128) tile / single grid step.
    x_small = jax.random.normal(kx, (8, n_feature), dtype=jnp.float32)
    out_small = net_forward(x_small, w1, b1, w2, b2)
    jax.block_until_ready(out_small)
    ref_small = _reference(x_small, w1, b1, w2, b2)
    assert out_small.shape == (8, n_output)
    assert jnp.allclose(out_small, ref_small, atol=1e-5, rtol=1e-5)

    # Medium batch: pads 1000 -> 1024 (8 rows x 128 lanes), single grid step.
    x_med = jax.random.normal(kx2, (1000, n_feature), dtype=jnp.float32)
    out_med = net_forward(x_med, w1, b1, w2, b2)
    jax.block_until_ready(out_med)
    ref_med = _reference(x_med, w1, b1, w2, b2)
    assert out_med.shape == (1000, n_output)
    assert jnp.allclose(out_med, ref_med, atol=1e-5, rtol=1e-5)

    # Multi-step grid with a partial last tile (rows=40, block_rows=16 -> 3
    # steps), exercising the "parallel" batch axis and edge handling.
    x_big = jax.random.normal(kx3, (5000, n_feature), dtype=jnp.float32)
    out_big = net_forward(x_big, w1, b1, w2, b2, block_rows=16)
    jax.block_until_ready(out_big)
    ref_big = _reference(x_big, w1, b1, w2, b2)
    assert out_big.shape == (5000, n_output)
    assert jnp.allclose(out_big, ref_big, atol=1e-5, rtol=1e-5)

    print("KERNEL_OK")
</pallas_src>

<mosaic_0001>
module attributes {stable_mosaic.version = 11 : i64} {
  func.func @_mlp_kernel(%arg0: i32, %arg1: memref<97xf32, #tpu.memory_space<smem>>, %arg2: memref<1x128xf32, #tpu.memory_space<vmem>>, %arg3: memref<1x128xf32, #tpu.memory_space<vmem>>) attributes {dimension_semantics = [#tpu.dimension_semantics<parallel>], iteration_bounds = array<i64: 1>, scalar_prefetch = 0 : i64, scratch_operands = 0 : i64, tpu.core_type = #tpu.core_type<tc>, window_params = [{transform_indices = @transform_0, window_bounds = array<i64: 97>}, {transform_indices = @transform_1, window_bounds = array<i64: 1, 128>}, {transform_indices = @transform_2, window_bounds = array<i64: 1, 128>}]} {
    %c0 = arith.constant 0 : index
    %c0_0 = arith.constant 0 : index
    %0 = vector.load %arg2[%c0, %c0_0] : memref<1x128xf32, #tpu.memory_space<vmem>>, vector<1x128xf32>
    %c96 = arith.constant 96 : index
    %1 = memref.load %arg1[%c96] : memref<97xf32, #tpu.memory_space<smem>>
    %2 = vector.broadcast %1 : f32 to vector<1x128xf32>
    %c0_1 = arith.constant 0 : index
    %3 = memref.load %arg1[%c0_1] : memref<97xf32, #tpu.memory_space<smem>>
    %c32 = arith.constant 32 : index
    %4 = memref.load %arg1[%c32] : memref<97xf32, #tpu.memory_space<smem>>
    %c64 = arith.constant 64 : index
    %5 = memref.load %arg1[%c64] : memref<97xf32, #tpu.memory_space<smem>>
    %6 = vector.broadcast %3 : f32 to vector<1x128xf32>
    %7 = arith.mulf %6, %0 : vector<1x128xf32>
    %8 = vector.broadcast %4 : f32 to vector<1x128xf32>
    %9 = arith.addf %7, %8 : vector<1x128xf32>
    %cst = arith.constant 0.000000e+00 : f32
    %10 = vector.broadcast %cst : f32 to vector<1x128xf32>
    %11 = arith.maximumf %9, %10 : vector<1x128xf32>
    %12 = vector.broadcast %5 : f32 to vector<1x128xf32>
    %13 = arith.mulf %12, %11 : vector<1x128xf32>
    %14 = arith.addf %2, %13 : vector<1x128xf32>
    %c1 = arith.constant 1 : index
    %15 = memref.load %arg1[%c1] : memref<97xf32, #tpu.memory_space<smem>>
    %c33 = arith.constant 33 : index
    %16 = memref.load %arg1[%c33] : memref<97xf32, #tpu.memory_space<smem>>
    %c65 = arith.constant 65 : index
    %17 = memref.load %arg1[%c65] : memref<97xf32, #tpu.memory_space<smem>>
    %18 = vector.broadcast %15 : f32 to vector<1x128xf32>
    %19 = arith.mulf %18, %0 : vector<1x128xf32>
    %20 = vector.broadcast %16 : f32 to vector<1x128xf32>
    %21 = arith.addf %19, %20 : vector<1x128xf32>
    %cst_2 = arith.constant 0.000000e+00 : f32
    %22 = vector.broadcast %cst_2 : f32 to vector<1x128xf32>
    %23 = arith.maximumf %21, %22 : vector<1x128xf32>
    %24 = vector.broadcast %17 : f32 to vector<1x128xf32>
    %25 = arith.mulf %24, %23 : vector<1x128xf32>
    %26 = arith.addf %14, %25 : vector<1x128xf32>
    %c2 = arith.constant 2 : index
    %27 = memref.load %arg1[%c2] : memref<97xf32, #tpu.memory_space<smem>>
    %c34 = arith.constant 34 : index
    %28 = memref.load %arg1[%c34] : memref<97xf32, #tpu.memory_space<smem>>
    %c66 = arith.constant 66 : index
    %29 = memref.load %arg1[%c66] : memref<97xf32, #tpu.memory_space<smem>>
    %30 = vector.broadcast %27 : f32 to vector<1x128xf32>
    %31 = arith.mulf %30, %0 : vector<1x128xf32>
    %32 = vector.broadcast %28 : f32 to vector<1x128xf32>
    %33 = arith.addf %31, %32 : vector<1x128xf32>
    %cst_3 = arith.constant 0.000000e+00 : f32
    %34 = vector.broadcast %cst_3 : f32 to vector<1x128xf32>
    %35 = arith.maximumf %33, %34 : vector<1x128xf32>
    %36 = vector.broadcast %29 : f32 to vector<1x128xf32>
    %37 = arith.mulf %36, %35 : vector<1x128xf32>
    %38 = arith.addf %26, %37 : vector<1x128xf32>
    %c3 = arith.constant 3 : index
    %39 = memref.load %arg1[%c3] : memref<97xf32, #tpu.memory_space<smem>>
    %c35 = arith.constant 35 : index
    %40 = memref.load %arg1[%c35] : memref<97xf32, #tpu.memory_space<smem>>
    %c67 = arith.constant 67 : index
    %41 = memref.load %arg1[%c67] : memref<97xf32, #tpu.memory_space<smem>>
    %42 = vector.broadcast %39 : f32 to vector<1x128xf32>
    %43 = arith.mulf %42, %0 : vector<1x128xf32>
    %44 = vector.broadcast %40 : f32 to vector<1x128xf32>
    %45 = arith.addf %43, %44 : vector<1x128xf32>
    %cst_4 = arith.constant 0.000000e+00 : f32
    %46 = vector.broadcast %cst_4 : f32 to vector<1x128xf32>
    %47 = arith.maximumf %45, %46 : vector<1x128xf32>
    %48 = vector.broadcast %41 : f32 to vector<1x128xf32>
    %49 = arith.mulf %48, %47 : vector<1x128xf32>
    %50 = arith.addf %38, %49 : vector<1x128xf32>
    %c4 = arith.constant 4 : index
    %51 = memref.load %arg1[%c4] : memref<97xf32, #tpu.memory_space<smem>>
    %c36 = arith.constant 36 : index
    %52 = memref.load %arg1[%c36] : memref<97xf32, #tpu.memory_space<smem>>
    %c68 = arith.constant 68 : index
    %53 = memref.load %arg1[%c68] : memref<97xf32, #tpu.memory_space<smem>>
    %54 = vector.broadcast %51 : f32 to vector<1x128xf32>
    %55 = arith.mulf %54, %0 : vector<1x128xf32>
    %56 = vector.broadcast %52 : f32 to vector<1x128xf32>
    %57 = arith.addf %55, %56 : vector<1x128xf32>
    %cst_5 = arith.constant 0.000000e+00 : f32
    %58 = vector.broadcast %cst_5 : f32 to vector<1x128xf32>
    %59 = arith.maximumf %57, %58 : vector<1x128xf32>
    %60 = vector.broadcast %53 : f32 to vector<1x128xf32>
    %61 = arith.mulf %60, %59 : vector<1x128xf32>
    %62 = arith.addf %50, %61 : vector<1x128xf32>
    %c5 = arith.constant 5 : index
    %63 = memref.load %arg1[%c5] : memref<97xf32, #tpu.memory_space<smem>>
    %c37 = arith.constant 37 : index
    %64 = memref.load %arg1[%c37] : memref<97xf32, #tpu.memory_space<smem>>
    %c69 = arith.constant 69 : index
    %65 = memref.load %arg1[%c69] : memref<97xf32, #tpu.memory_space<smem>>
    %66 = vector.broadcast %63 : f32 to vector<1x128xf32>
    %67 = arith.mulf %66, %0 : vector<1x128xf32>
    %68 = vector.broadcast %64 : f32 to vector<1x128xf32>
    %69 = arith.addf %67, %68 : vector<1x128xf32>
    %cst_6 = arith.constant 0.000000e+00 : f32
    %70 = vector.broadcast %cst_6 : f32 to vector<1x128xf32>
    %71 = arith.maximumf %69, %70 : vector<1x128xf32>
    %72 = vector.broadcast %65 : f32 to vector<1x128xf32>
    %73 = arith.mulf %72, %71 : vector<1x128xf32>
    %74 = arith.addf %62, %73 : vector<1x128xf32>
    %c6 = arith.constant 6 : index
    %75 = memref.load %arg1[%c6] : memref<97xf32, #tpu.memory_space<smem>>
    %c38 = arith.constant 38 : index
    %76 = memref.load %arg1[%c38] : memref<97xf32, #tpu.memory_space<smem>>
    %c70 = arith.constant 70 : index
    %77 = memref.load %arg1[%c70] : memref<97xf32, #tpu.memory_space<smem>>
    %78 = vector.broadcast %75 : f32 to vector<1x128xf32>
    %79 = arith.mulf %78, %0 : vector<1x128xf32>
    %80 = vector.broadcast %76 : f32 to vector<1x128xf32>
    %81 = arith.addf %79, %80 : vector<1x128xf32>
    %cst_7 = arith.constant 0.000000e+00 : f32
    %82 = vector.broadcast %cst_7 : f32 to vector<1x128xf32>
    %83 = arith.maximumf %81, %82 : vector<1x128xf32>
    %84 = vector.broadcast %77 : f32 to vector<1x128xf32>
    %85 = arith.mulf %84, %83 : vector<1x128xf32>
    %86 = arith.addf %74, %85 : vector<1x128xf32>
    %c7 = arith.constant 7 : index
    %87 = memref.load %arg1[%c7] : memref<97xf32, #tpu.memory_space<smem>>
    %c39 = arith.constant 39 : index
    %88 = memref.load %arg1[%c39] : memref<97xf32, #tpu.memory_space<smem>>
    %c71 = arith.constant 71 : index
    %89 = memref.load %arg1[%c71] : memref<97xf32, #tpu.memory_space<smem>>
    %90 = vector.broadcast %87 : f32 to vector<1x128xf32>
    %91 = arith.mulf %90, %0 : vector<1x128xf32>
    %92 = vector.broadcast %88 : f32 to vector<1x128xf32>
    %93 = arith.addf %91, %92 : vector<1x128xf32>
    %cst_8 = arith.constant 0.000000e+00 : f32
    %94 = vector.broadcast %cst_8 : f32 to vector<1x128xf32>
    %95 = arith.maximumf %93, %94 : vector<1x128xf32>
    %96 = vector.broadcast %89 : f32 to vector<1x128xf32>
    %97 = arith.mulf %96, %95 : vector<1x128xf32>
    %98 = arith.addf %86, %97 : vector<1x128xf32>
    %c8 = arith.constant 8 : index
    %99 = memref.load %arg1[%c8] : memref<97xf32, #tpu.memory_space<smem>>
    %c40 = arith.constant 40 : index
    %100 = memref.load %arg1[%c40] : memref<97xf32, #tpu.memory_space<smem>>
    %c72 = arith.constant 72 : index
    %101 = memref.load %arg1[%c72] : memref<97xf32, #tpu.memory_space<smem>>
    %102 = vector.broadcast %99 : f32 to vector<1x128xf32>
    %103 = arith.mulf %102, %0 : vector<1x128xf32>
    %104 = vector.broadcast %100 : f32 to vector<1x128xf32>
    %105 = arith.addf %103, %104 : vector<1x128xf32>
    %cst_9 = arith.constant 0.000000e+00 : f32
    %106 = vector.broadcast %cst_9 : f32 to vector<1x128xf32>
    %107 = arith.maximumf %105, %106 : vector<1x128xf32>
    %108 = vector.broadcast %101 : f32 to vector<1x128xf32>
    %109 = arith.mulf %108, %107 : vector<1x128xf32>
    %110 = arith.addf %98, %109 : vector<1x128xf32>
    %c9 = arith.constant 9 : index
    %111 = memref.load %arg1[%c9] : memref<97xf32, #tpu.memory_space<smem>>
    %c41 = arith.constant 41 : index
    %112 = memref.load %arg1[%c41] : memref<97xf32, #tpu.memory_space<smem>>
    %c73 = arith.constant 73 : index
    %113 = memref.load %arg1[%c73] : memref<97xf32, #tpu.memory_space<smem>>
    %114 = vector.broadcast %111 : f32 to vector<1x128xf32>
    %115 = arith.mulf %114, %0 : vector<1x128xf32>
    %116 = vector.broadcast %112 : f32 to vector<1x128xf32>
    %117 = arith.addf %115, %116 : vector<1x128xf32>
    %cst_10 = arith.constant 0.000000e+00 : f32
    %118 = vector.broadcast %cst_10 : f32 to vector<1x128xf32>
    %119 = arith.maximumf %117, %118 : vector<1x128xf32>
    %120 = vector.broadcast %113 : f32 to vector<1x128xf32>
    %121 = arith.mulf %120, %119 : vector<1x128xf32>
    %122 = arith.addf %110, %121 : vector<1x128xf32>
    %c10 = arith.constant 10 : index
    %123 = memref.load %arg1[%c10] : memref<97xf32, #tpu.memory_space<smem>>
    %c42 = arith.constant 42 : index
    %124 = memref.load %arg1[%c42] : memref<97xf32, #tpu.memory_space<smem>>
    %c74 = arith.constant 74 : index
    %125 = memref.load %arg1[%c74] : memref<97xf32, #tpu.memory_space<smem>>
    %126 = vector.broadcast %123 : f32 to vector<1x128xf32>
    %127 = arith.mulf %126, %0 : vector<1x128xf32>
    %128 = vector.broadcast %124 : f32 to vector<1x128xf32>
    %129 = arith.addf %127, %128 : vector<1x128xf32>
    %cst_11 = arith.constant 0.000000e+00 : f32
    %130 = vector.broadcast %cst_11 : f32 to vector<1x128xf32>
    %131 = arith.maximumf %129, %130 : vector<1x128xf32>
    %132 = vector.broadcast %125 : f32 to vector<1x128xf32>
    %133 = arith.mulf %132, %131 : vector<1x128xf32>
    %134 = arith.addf %122, %133 : vector<1x128xf32>
    %c11 = arith.constant 11 : index
    %135 = memref.load %arg1[%c11] : memref<97xf32, #tpu.memory_space<smem>>
    %c43 = arith.constant 43 : index
    %136 = memref.load %arg1[%c43] : memref<97xf32, #tpu.memory_space<smem>>
    %c75 = arith.constant 75 : index
    %137 = memref.load %arg1[%c75] : memref<97xf32, #tpu.memory_space<smem>>
    %138 = vector.broadcast %135 : f32 to vector<1x128xf32>
    %139 = arith.mulf %138, %0 : vector<1x128xf32>
    %140 = vector.broadcast %136 : f32 to vector<1x128xf32>
    %141 = arith.addf %139, %140 : vector<1x128xf32>
    %cst_12 = arith.constant 0.000000e+00 : f32
    %142 = vector.broadcast %cst_12 : f32 to vector<1x128xf32>
    %143 = arith.maximumf %141, %142 : vector<1x128xf32>
    %144 = vector.broadcast %137 : f32 to vector<1x128xf32>
    %145 = arith.mulf %144, %143 : vector<1x128xf32>
    %146 = arith.addf %134, %145 : vector<1x128xf32>
    %c12 = arith.constant 12 : index
    %147 = memref.load %arg1[%c12] : memref<97xf32, #tpu.memory_space<smem>>
    %c44 = arith.constant 44 : index
    %148 = memref.load %arg1[%c44] : memref<97xf32, #tpu.memory_space<smem>>
    %c76 = arith.constant 76 : index
    %149 = memref.load %arg1[%c76] : memref<97xf32, #tpu.memory_space<smem>>
    %150 = vector.broadcast %147 : f32 to vector<1x128xf32>
    %151 = arith.mulf %150, %0 : vector<1x128xf32>
    %152 = vector.broadcast %148 : f32 to vector<1x128xf32>
    %153 = arith.addf %151, %152 : vector<1x128xf32>
    %cst_13 = arith.constant 0.000000e+00 : f32
    %154 = vector.broadcast %cst_13 : f32 to vector<1x128xf32>
    %155 = arith.maximumf %153, %154 : vector<1x128xf32>
    %156 = vector.broadcast %149 : f32 to vector<1x128xf32>
    %157 = arith.mulf %156, %155 : vector<1x128xf32>
    %158 = arith.addf %146, %157 : vector<1x128xf32>
    %c13 = arith.constant 13 : index
    %159 = memref.load %arg1[%c13] : memref<97xf32, #tpu.memory_space<smem>>
    %c45 = arith.constant 45 : index
    %160 = memref.load %arg1[%c45] : memref<97xf32, #tpu.memory_space<smem>>
    %c77 = arith.constant 77 : index
    %161 = memref.load %arg1[%c77] : memref<97xf32, #tpu.memory_space<smem>>
    %162 = vector.broadcast %159 : f32 to vector<1x128xf32>
    %163 = arith.mulf %162, %0 : vector<1x128xf32>
    %164 = vector.broadcast %160 : f32 to vector<1x128xf32>
    %165 = arith.addf %163, %164 : vector<1x128xf32>
    %cst_14 = arith.constant 0.000000e+00 : f32
    %166 = vector.broadcast %cst_14 : f32 to vector<1x128xf32>
    %167 = arith.maximumf %165, %166 : vector<1x128xf32>
    %168 = vector.broadcast %161 : f32 to vector<1x128xf32>
    %169 = arith.mulf %168, %167 : vector<1x128xf32>
    %170 = arith.addf %158, %169 : vector<1x128xf32>
    %c14 = arith.constant 14 : index
    %171 = memref.load %arg1[%c14] : memref<97xf32, #tpu.memory_space<smem>>
    %c46 = arith.constant 46 : index
    %172 = memref.load %arg1[%c46] : memref<97xf32, #tpu.memory_space<smem>>
    %c78 = arith.constant 78 : index
    %173 = memref.load %arg1[%c78] : memref<97xf32, #tpu.memory_space<smem>>
    %174 = vector.broadcast %171 : f32 to vector<1x128xf32>
    %175 = arith.mulf %174, %0 : vector<1x128xf32>
    %176 = vector.broadcast %172 : f32 to vector<1x128xf32>
    %177 = arith.addf %175, %176 : vector<1x128xf32>
    %cst_15 = arith.constant 0.000000e+00 : f32
    %178 = vector.broadcast %cst_15 : f32 to vector<1x128xf32>
    %179 = arith.maximumf %177, %178 : vector<1x128xf32>
    %180 = vector.broadcast %173 : f32 to vector<1x128xf32>
    %181 = arith.mulf %180, %179 : vector<1x128xf32>
    %182 = arith.addf %170, %181 : vector<1x128xf32>
    %c15 = arith.constant 15 : index
    %183 = memref.load %arg1[%c15] : memref<97xf32, #tpu.memory_space<smem>>
    %c47 = arith.constant 47 : index
    %184 = memref.load %arg1[%c47] : memref<97xf32, #tpu.memory_space<smem>>
    %c79 = arith.constant 79 : index
    %185 = memref.load %arg1[%c79] : memref<97xf32, #tpu.memory_space<smem>>
    %186 = vector.broadcast %183 : f32 to vector<1x128xf32>
    %187 = arith.mulf %186, %0 : vector<1x128xf32>
    %188 = vector.broadcast %184 : f32 to vector<1x128xf32>
    %189 = arith.addf %187, %188 : vector<1x128xf32>
    %cst_16 = arith.constant 0.000000e+00 : f32
    %190 = vector.broadcast %cst_16 : f32 to vector<1x128xf32>
    %191 = arith.maximumf %189, %190 : vector<1x128xf32>
    %192 = vector.broadcast %185 : f32 to vector<1x128xf32>
    %193 = arith.mulf %192, %191 : vector<1x128xf32>
    %194 = arith.addf %182, %193 : vector<1x128xf32>
    %c16 = arith.constant 16 : index
    %195 = memref.load %arg1[%c16] : memref<97xf32, #tpu.memory_space<smem>>
    %c48 = arith.constant 48 : index
    %196 = memref.load %arg1[%c48] : memref<97xf32, #tpu.memory_space<smem>>
    %c80 = arith.constant 80 : index
    %197 = memref.load %arg1[%c80] : memref<97xf32, #tpu.memory_space<smem>>
    %198 = vector.broadcast %195 : f32 to vector<1x128xf32>
    %199 = arith.mulf %198, %0 : vector<1x128xf32>
    %200 = vector.broadcast %196 : f32 to vector<1x128xf32>
    %201 = arith.addf %199, %200 : vector<1x128xf32>
    %cst_17 = arith.constant 0.000000e+00 : f32
    %202 = vector.broadcast %cst_17 : f32 to vector<1x128xf32>
    %203 = arith.maximumf %201, %202 : vector<1x128xf32>
    %204 = vector.broadcast %197 : f32 to vector<1x128xf32>
    %205 = arith.mulf %204, %203 : vector<1x128xf32>
    %206 = arith.addf %194, %205 : vector<1x128xf32>
    %c17 = arith.constant 17 : index
    %207 = memref.load %arg1[%c17] : memref<97xf32, #tpu.memory_space<smem>>
    %c49 = arith.constant 49 : index
    %208 = memref.load %arg1[%c49] : memref<97xf32, #tpu.memory_space<smem>>
    %c81 = arith.constant 81 : index
    %209 = memref.load %arg1[%c81] : memref<97xf32, #tpu.memory_space<smem>>
    %210 = vector.broadcast %207 : f32 to vector<1x128xf32>
    %211 = arith.mulf %210, %0 : vector<1x128xf32>
    %212 = vector.broadcast %208 : f32 to vector<1x128xf32>
    %213 = arith.addf %211, %212 : vector<1x128xf32>
    %cst_18 = arith.constant 0.000000e+00 : f32
    %214 = vector.broadcast %cst_18 : f32 to vector<1x128xf32>
    %215 = arith.maximumf %213, %214 : vector<1x128xf32>
    %216 = vector.broadcast %209 : f32 to vector<1x128xf32>
    %217 = arith.mulf %216, %215 : vector<1x128xf32>
    %218 = arith.addf %206, %217 : vector<1x128xf32>
    %c18 = arith.constant 18 : index
    %219 = memref.load %arg1[%c18] : memref<97xf32, #tpu.memory_space<smem>>
    %c50 = arith.constant 50 : index
    %220 = memref.load %arg1[%c50] : memref<97xf32, #tpu.memory_space<smem>>
    %c82 = arith.constant 82 : index
    %221 = memref.load %arg1[%c82] : memref<97xf32, #tpu.memory_space<smem>>
    %222 = vector.broadcast %219 : f32 to vector<1x128xf32>
    %223 = arith.mulf %222, %0 : vector<1x128xf32>
    %224 = vector.broadcast %220 : f32 to vector<1x128xf32>
    %225 = arith.addf %223, %224 : vector<1x128xf32>
    %cst_19 = arith.constant 0.000000e+00 : f32
    %226 = vector.broadcast %cst_19 : f32 to vector<1x128xf32>
    %227 = arith.maximumf %225, %226 : vector<1x128xf32>
    %228 = vector.broadcast %221 : f32 to vector<1x128xf32>
    %229 = arith.mulf %228, %227 : vector<1x128xf32>
    %230 = arith.addf %218, %229 : vector<1x128xf32>
    %c19 = arith.constant 19 : index
    %231 = memref.load %arg1[%c19] : memref<97xf32, #tpu.memory_space<smem>>
    %c51 = arith.constant 51 : index
    %232 = memref.load %arg1[%c51] : memref<97xf32, #tpu.memory_space<smem>>
    %c83 = arith.constant 83 : index
    %233 = memref.load %arg1[%c83] : memref<97xf32, #tpu.memory_space<smem>>
    %234 = vector.broadcast %231 : f32 to vector<1x128xf32>
    %235 = arith.mulf %234, %0 : vector<1x128xf32>
    %236 = vector.broadcast %232 : f32 to vector<1x128xf32>
    %237 = arith.addf %235, %236 : vector<1x128xf32>
    %cst_20 = arith.constant 0.000000e+00 : f32
    %238 = vector.broadcast %cst_20 : f32 to vector<1x128xf32>
    %239 = arith.maximumf %237, %238 : vector<1x128xf32>
    %240 = vector.broadcast %233 : f32 to vector<1x128xf32>
    %241 = arith.mulf %240, %239 : vector<1x128xf32>
    %242 = arith.addf %230, %241 : vector<1x128xf32>
    %c20 = arith.constant 20 : index
    %243 = memref.load %arg1[%c20] : memref<97xf32, #tpu.memory_space<smem>>
    %c52 = arith.constant 52 : index
    %244 = memref.load %arg1[%c52] : memref<97xf32, #tpu.memory_space<smem>>
    %c84 = arith.constant 84 : index
    %245 = memref.load %arg1[%c84] : memref<97xf32, #tpu.memory_space<smem>>
    %246 = vector.broadcast %243 : f32 to vector<1x128xf32>
    %247 = arith.mulf %246, %0 : vector<1x128xf32>
    %248 = vector.broadcast %244 : f32 to vector<1x128xf32>
    %249 = arith.addf %247, %248 : vector<1x128xf32>
    %cst_21 = arith.constant 0.000000e+00 : f32
    %250 = vector.broadcast %cst_21 : f32 to vector<1x128xf32>
    %251 = arith.maximumf %249, %250 : vector<1x128xf32>
    %252 = vector.broadcast %245 : f32 to vector<1x128xf32>
    %253 = arith.mulf %252, %251 : vector<1x128xf32>
    %254 = arith.addf %242, %253 : vector<1x128xf32>
    %c21 = arith.constant 21 : index
    %255 = memref.load %arg1[%c21] : memref<97xf32, #tpu.memory_space<smem>>
    %c53 = arith.constant 53 : index
    %256 = memref.load %arg1[%c53] : memref<97xf32, #tpu.memory_space<smem>>
    %c85 = arith.constant 85 : index
    %257 = memref.load %arg1[%c85] : memref<97xf32, #tpu.memory_space<smem>>
    %258 = vector.broadcast %255 : f32 to vector<1x128xf32>
    %259 = arith.mulf %258, %0 : vector<1x128xf32>
    %260 = vector.broadcast %256 : f32 to vector<1x128xf32>
    %261 = arith.addf %259, %260 : vector<1x128xf32>
    %cst_22 = arith.constant 0.000000e+00 : f32
    %262 = vector.broadcast %cst_22 : f32 to vector<1x128xf32>
    %263 = arith.maximumf %261, %262 : vector<1x128xf32>
    %264 = vector.broadcast %257 : f32 to vector<1x128xf32>
    %265 = arith.mulf %264, %263 : vector<1x128xf32>
    %266 = arith.addf %254, %265 : vector<1x128xf32>
    %c22 = arith.constant 22 : index
    %267 = memref.load %arg1[%c22] : memref<97xf32, #tpu.memory_space<smem>>
    %c54 = arith.constant 54 : index
    %268 = memref.load %arg1[%c54] : memref<97xf32, #tpu.memory_space<smem>>
    %c86 = arith.constant 86 : index
    %269 = memref.load %arg1[%c86] : memref<97xf32, #tpu.memory_space<smem>>
    %270 = vector.broadcast %267 : f32 to vector<1x128xf32>
    %271 = arith.mulf %270, %0 : vector<1x128xf32>
    %272 = vector.broadcast %268 : f32 to vector<1x128xf32>
    %273 = arith.addf %271, %272 : vector<1x128xf32>
    %cst_23 = arith.constant 0.000000e+00 : f32
    %274 = vector.broadcast %cst_23 : f32 to vector<1x128xf32>
    %275 = arith.maximumf %273, %274 : vector<1x128xf32>
    %276 = vector.broadcast %269 : f32 to vector<1x128xf32>
    %277 = arith.mulf %276, %275 : vector<1x128xf32>
    %278 = arith.addf %266, %277 : vector<1x128xf32>
    %c23 = arith.constant 23 : index
    %279 = memref.load %arg1[%c23] : memref<97xf32, #tpu.memory_space<smem>>
    %c55 = arith.constant 55 : index
    %280 = memref.load %arg1[%c55] : memref<97xf32, #tpu.memory_space<smem>>
    %c87 = arith.constant 87 : index
    %281 = memref.load %arg1[%c87] : memref<97xf32, #tpu.memory_space<smem>>
    %282 = vector.broadcast %279 : f32 to vector<1x128xf32>
    %283 = arith.mulf %282, %0 : vector<1x128xf32>
    %284 = vector.broadcast %280 : f32 to vector<1x128xf32>
    %285 = arith.addf %283, %284 : vector<1x128xf32>
    %cst_24 = arith.constant 0.000000e+00 : f32
    %286 = vector.broadcast %cst_24 : f32 to vector<1x128xf32>
    %287 = arith.maximumf %285, %286 : vector<1x128xf32>
    %288 = vector.broadcast %281 : f32 to vector<1x128xf32>
    %289 = arith.mulf %288, %287 : vector<1x128xf32>
    %290 = arith.addf %278, %289 : vector<1x128xf32>
    %c24 = arith.constant 24 : index
    %291 = memref.load %arg1[%c24] : memref<97xf32, #tpu.memory_space<smem>>
    %c56 = arith.constant 56 : index
    %292 = memref.load %arg1[%c56] : memref<97xf32, #tpu.memory_space<smem>>
    %c88 = arith.constant 88 : index
    %293 = memref.load %arg1[%c88] : memref<97xf32, #tpu.memory_space<smem>>
    %294 = vector.broadcast %291 : f32 to vector<1x128xf32>
    %295 = arith.mulf %294, %0 : vector<1x128xf32>
    %296 = vector.broadcast %292 : f32 to vector<1x128xf32>
    %297 = arith.addf %295, %296 : vector<1x128xf32>
    %cst_25 = arith.constant 0.000000e+00 : f32
    %298 = vector.broadcast %cst_25 : f32 to vector<1x128xf32>
    %299 = arith.maximumf %297, %298 : vector<1x128xf32>
    %300 = vector.broadcast %293 : f32 to vector<1x128xf32>
    %301 = arith.mulf %300, %299 : vector<1x128xf32>
    %302 = arith.addf %290, %301 : vector<1x128xf32>
    %c25 = arith.constant 25 : index
    %303 = memref.load %arg1[%c25] : memref<97xf32, #tpu.memory_space<smem>>
    %c57 = arith.constant 57 : index
    %304 = memref.load %arg1[%c57] : memref<97xf32, #tpu.memory_space<smem>>
    %c89 = arith.constant 89 : index
    %305 = memref.load %arg1[%c89] : memref<97xf32, #tpu.memory_space<smem>>
    %306 = vector.broadcast %303 : f32 to vector<1x128xf32>
    %307 = arith.mulf %306, %0 : vector<1x128xf32>
    %308 = vector.broadcast %304 : f32 to vector<1x128xf32>
    %309 = arith.addf %307, %308 : vector<1x128xf32>
    %cst_26 = arith.constant 0.000000e+00 : f32
    %310 = vector.broadcast %cst_26 : f32 to vector<1x128xf32>
    %311 = arith.maximumf %309, %310 : vector<1x128xf32>
    %312 = vector.broadcast %305 : f32 to vector<1x128xf32>
    %313 = arith.mulf %312, %311 : vector<1x128xf32>
    %314 = arith.addf %302, %313 : vector<1x128xf32>
    %c26 = arith.constant 26 : index
    %315 = memref.load %arg1[%c26] : memref<97xf32, #tpu.memory_space<smem>>
    %c58 = arith.constant 58 : index
    %316 = memref.load %arg1[%c58] : memref<97xf32, #tpu.memory_space<smem>>
    %c90 = arith.constant 90 : index
    %317 = memref.load %arg1[%c90] : memref<97xf32, #tpu.memory_space<smem>>
    %318 = vector.broadcast %315 : f32 to vector<1x128xf32>
    %319 = arith.mulf %318, %0 : vector<1x128xf32>
    %320 = vector.broadcast %316 : f32 to vector<1x128xf32>
    %321 = arith.addf %319, %320 : vector<1x128xf32>
    %cst_27 = arith.constant 0.000000e+00 : f32
    %322 = vector.broadcast %cst_27 : f32 to vector<1x128xf32>
    %323 = arith.maximumf %321, %322 : vector<1x128xf32>
    %324 = vector.broadcast %317 : f32 to vector<1x128xf32>
    %325 = arith.mulf %324, %323 : vector<1x128xf32>
    %326 = arith.addf %314, %325 : vector<1x128xf32>
    %c27 = arith.constant 27 : index
    %327 = memref.load %arg1[%c27] : memref<97xf32, #tpu.memory_space<smem>>
    %c59 = arith.constant 59 : index
    %328 = memref.load %arg1[%c59] : memref<97xf32, #tpu.memory_space<smem>>
    %c91 = arith.constant 91 : index
    %329 = memref.load %arg1[%c91] : memref<97xf32, #tpu.memory_space<smem>>
    %330 = vector.broadcast %327 : f32 to vector<1x128xf32>
    %331 = arith.mulf %330, %0 : vector<1x128xf32>
    %332 = vector.broadcast %328 : f32 to vector<1x128xf32>
    %333 = arith.addf %331, %332 : vector<1x128xf32>
    %cst_28 = arith.constant 0.000000e+00 : f32
    %334 = vector.broadcast %cst_28 : f32 to vector<1x128xf32>
    %335 = arith.maximumf %333, %334 : vector<1x128xf32>
    %336 = vector.broadcast %329 : f32 to vector<1x128xf32>
    %337 = arith.mulf %336, %335 : vector<1x128xf32>
    %338 = arith.addf %326, %337 : vector<1x128xf32>
    %c28 = arith.constant 28 : index
    %339 = memref.load %arg1[%c28] : memref<97xf32, #tpu.memory_space<smem>>
    %c60 = arith.constant 60 : index
    %340 = memref.load %arg1[%c60] : memref<97xf32, #tpu.memory_space<smem>>
    %c92 = arith.constant 92 : index
    %341 = memref.load %arg1[%c92] : memref<97xf32, #tpu.memory_space<smem>>
    %342 = vector.broadcast %339 : f32 to vector<1x128xf32>
    %343 = arith.mulf %342, %0 : vector<1x128xf32>
    %344 = vector.broadcast %340 : f32 to vector<1x128xf32>
    %345 = arith.addf %343, %344 : vector<1x128xf32>
    %cst_29 = arith.constant 0.000000e+00 : f32
    %346 = vector.broadcast %cst_29 : f32 to vector<1x128xf32>
    %347 = arith.maximumf %345, %346 : vector<1x128xf32>
    %348 = vector.broadcast %341 : f32 to vector<1x128xf32>
    %349 = arith.mulf %348, %347 : vector<1x128xf32>
    %350 = arith.addf %338, %349 : vector<1x128xf32>
    %c29 = arith.constant 29 : index
    %351 = memref.load %arg1[%c29] : memref<97xf32, #tpu.memory_space<smem>>
    %c61 = arith.constant 61 : index
    %352 = memref.load %arg1[%c61] : memref<97xf32, #tpu.memory_space<smem>>
    %c93 = arith.constant 93 : index
    %353 = memref.load %arg1[%c93] : memref<97xf32, #tpu.memory_space<smem>>
    %354 = vector.broadcast %351 : f32 to vector<1x128xf32>
    %355 = arith.mulf %354, %0 : vector<1x128xf32>
    %356 = vector.broadcast %352 : f32 to vector<1x128xf32>
    %357 = arith.addf %355, %356 : vector<1x128xf32>
    %cst_30 = arith.constant 0.000000e+00 : f32
    %358 = vector.broadcast %cst_30 : f32 to vector<1x128xf32>
    %359 = arith.maximumf %357, %358 : vector<1x128xf32>
    %360 = vector.broadcast %353 : f32 to vector<1x128xf32>
    %361 = arith.mulf %360, %359 : vector<1x128xf32>
    %362 = arith.addf %350, %361 : vector<1x128xf32>
    %c30 = arith.constant 30 : index
    %363 = memref.load %arg1[%c30] : memref<97xf32, #tpu.memory_space<smem>>
    %c62 = arith.constant 62 : index
    %364 = memref.load %arg1[%c62] : memref<97xf32, #tpu.memory_space<smem>>
    %c94 = arith.constant 94 : index
    %365 = memref.load %arg1[%c94] : memref<97xf32, #tpu.memory_space<smem>>
    %366 = vector.broadcast %363 : f32 to vector<1x128xf32>
    %367 = arith.mulf %366, %0 : vector<1x128xf32>
    %368 = vector.broadcast %364 : f32 to vector<1x128xf32>
    %369 = arith.addf %367, %368 : vector<1x128xf32>
    %cst_31 = arith.constant 0.000000e+00 : f32
    %370 = vector.broadcast %cst_31 : f32 to vector<1x128xf32>
    %371 = arith.maximumf %369, %370 : vector<1x128xf32>
    %372 = vector.broadcast %365 : f32 to vector<1x128xf32>
    %373 = arith.mulf %372, %371 : vector<1x128xf32>
    %374 = arith.addf %362, %373 : vector<1x128xf32>
    %c31 = arith.constant 31 : index
    %375 = memref.load %arg1[%c31] : memref<97xf32, #tpu.memory_space<smem>>
    %c63 = arith.constant 63 : index
    %376 = memref.load %arg1[%c63] : memref<97xf32, #tpu.memory_space<smem>>
    %c95 = arith.constant 95 : index
    %377 = memref.load %arg1[%c95] : memref<97xf32, #tpu.memory_space<smem>>
    %378 = vector.broadcast %375 : f32 to vector<1x128xf32>
    %379 = arith.mulf %378, %0 : vector<1x128xf32>
    %380 = vector.broadcast %376 : f32 to vector<1x128xf32>
    %381 = arith.addf %379, %380 : vector<1x128xf32>
    %cst_32 = arith.constant 0.000000e+00 : f32
    %382 = vector.broadcast %cst_32 : f32 to vector<1x128xf32>
    %383 = arith.maximumf %381, %382 : vector<1x128xf32>
    %384 = vector.broadcast %377 : f32 to vector<1x128xf32>
    %385 = arith.mulf %384, %383 : vector<1x128xf32>
    %386 = arith.addf %374, %385 : vector<1x128xf32>
    %c0_33 = arith.constant 0 : index
    %c0_34 = arith.constant 0 : index
    %387 = vector.load %arg3[%c0_33, %c0_34] : memref<1x128xf32, #tpu.memory_space<vmem>>, vector<1x128xf32>
    tpu.vector_store %arg3[%c0_33, %c0_34], %386 {strides = array<i32>} : memref<1x128xf32, #tpu.memory_space<vmem>>, vector<1x128xf32>,
    return
  }
  func.func @transform_0(%arg0: i32) -> i32 {
    %c0_i32 = arith.constant 0 : i32
    %c0_i32_0 = arith.constant 0 : i32
    return %c0_i32 : i32
  }
  func.func @transform_1(%arg0: i32) -> (i32, i32) {
    %c0_i32 = arith.constant 0 : i32
    %c0_i32_0 = arith.constant 0 : i32
    return %arg0, %c0_i32 : i32, i32
  }
  func.func @transform_2(%arg0: i32) -> (i32, i32) {
    %c0_i32 = arith.constant 0 : i32
    %c0_i32_0 = arith.constant 0 : i32
    return %arg0, %c0_i32 : i32, i32
  }
}

</mosaic_0001>

<llo_original>
// kernel: tpu_custom_call.1
$region0: #{tpu_custom_call.1}
  #allocation0 [shape = 'u32[]', space=smem, size = 0x4, offset = 0x4, fixed_abs, tag = 'smem constant byte address 0x4 - core index']
  #allocation1 [shape = 'u32[144,128]{1,0:T(1,128)}', space=vmem, size = 0x12000, scoped, tag = 'internal scratch']
  %s0 = inlined_call_operand.hbm [shape: f32[97], index: 0, kind: input, shape index: {}]
  %s1 = inlined_call_operand.vmem [shape: f32[1,128], index: 1, kind: input, shape index: {}]
  %s2 = inlined_call_operand.hbm [shape: f32[1,128], index: 2, kind: output, shape index: {}]
  %s3 = sld [smem:[#allocation0]]
  $region22: #{tpu_custom_call.1} parent=0
    _
  %s5 = ssub.s32 1, %s3
  %s6 = scalar_select 0, %s5, %s3
  $region1: #{tpu_custom_call.1} parent=0
    #allocation2 [shape = 'u8[512]{0}', space=smem, size = 0x200, scoped, tag = 'input window, operand 0, single buffered']
    #allocation3 [shape = 's32[1]{0}', space=sflag, size = 0x4, scoped, tag = 'scoped memory for tpu_custom_call.1']
    #allocation4 [shape = 's32[1]{0}', space=sflag, size = 0x4, scoped, tag = 'scoped memory for tpu_custom_call.1']
    #allocation5 [shape = 'u8[512]{0}', space=vmem, size = 0x400, scoped, tag = 'output window, operand 0, single buffered']
    %7 = vsyncpa [#allocation4], 0
    %8 = vsyncpa [#allocation3], 0
    // Predicated region
    $region2: #{tpu_custom_call.1} parent=1 // pred_check
      _
    $region3: #{tpu_custom_call.1} parent=1 // pred_check_branch
      %10 = sbr.rel (0) target = $region5
    $region4: #{tpu_custom_call.1} parent=1 // pred_region
      %s12 = ssub.s32 16, 16
      %13 = vsyncadd [#allocation4], %s12
      %16 = dma.hbm_to_smem %s0, 16, [#allocation2], [#allocation4]
    $region5: #{tpu_custom_call.1} parent=1 // pred_fallthru
      _
    // Predicated region
    $region6: #{tpu_custom_call.1} parent=1 // pred_check
      _
    $region7: #{tpu_custom_call.1} parent=1 // pred_check_branch
      %18 = sbr.rel (0) target = $region9
    $region8: #{tpu_custom_call.1} parent=1 // pred_region
      _
    $region9: #{tpu_custom_call.1} parent=1 // pred_fallthru
      _
    // Predicated region
    $region10: #{tpu_custom_call.1} parent=1 // pred_check
      _
    $region11: #{tpu_custom_call.1} parent=1 // pred_check_branch
      %20 = sbr.rel (0) target = $region13
    $region12: #{tpu_custom_call.1} parent=1 // pred_region
      %21 = dma.done [#allocation4], 16
    $region13: #{tpu_custom_call.1} parent=1 // pred_fallthru
      _
    %22 = sfence
    %v23 = vld [vmem:[%s1] sm:$0x1]
    %s24 = sld [smem:[#allocation2 + $0x60]]
    %v25 = vstv %s24
    %s26 = sld [smem:[#allocation2]]
    %s27 = sld [smem:[#allocation2 + $0x20]]
    %s28 = sld [smem:[#allocation2 + $0x40]]
    %v29 = vstv %s26
    %v30 = vmul.f32 %v29, %v23
    %v31 = vstv %s27
    %v32 = vadd.f32 %v30, %v31
    %v33 = vmax.f32 %v32, 0.0
    %v34 = vstv %s28
    %v35 = vmul.f32 %v34, %v33
    %v36 = vadd.f32 %v25, %v35
    %s37 = sld [smem:[#allocation2 + $0x1]]
    %s38 = sld [smem:[#allocation2 + $0x21]]
    %s39 = sld [smem:[#allocation2 + $0x41]]
    %v40 = vstv %s37
    %v41 = vmul.f32 %v40, %v23
    %v42 = vstv %s38
    %v43 = vadd.f32 %v41, %v42
    %v44 = vmax.f32 %v43, 0.0
    %v45 = vstv %s39
    %v46 = vmul.f32 %v45, %v44
    %v47 = vadd.f32 %v36, %v46
    %s48 = sld [smem:[#allocation2 + $0x2]]
    %s49 = sld [smem:[#allocation2 + $0x22]]
    %s50 = sld [smem:[#allocation2 + $0x42]]
    %v51 = vstv %s48
    %v52 = vmul.f32 %v51, %v23
    %v53 = vstv %s49
    %v54 = vadd.f32 %v52, %v53
    %v55 = vmax.f32 %v54, 0.0
    %v56 = vstv %s50
    %v57 = vmul.f32 %v56, %v55
    %v58 = vadd.f32 %v47, %v57
    %s59 = sld [smem:[#allocation2 + $0x3]]
    %s60 = sld [smem:[#allocation2 + $0x23]]
    %s61 = sld [smem:[#allocation2 + $0x43]]
    %v62 = vstv %s59
    %v63 = vmul.f32 %v62, %v23
    %v64 = vstv %s60
    %v65 = vadd.f32 %v63, %v64
    %v66 = vmax.f32 %v65, 0.0
    %v67 = vstv %s61
    %v68 = vmul.f32 %v67, %v66
    %v69 = vadd.f32 %v58, %v68
    %s70 = sld [smem:[#allocation2 + $0x4]]
    %s71 = sld [smem:[#allocation2 + $0x24]]
    %s72 = sld [smem:[#allocation2 + $0x44]]
    %v73 = vstv %s70
    %v74 = vmul.f32 %v73, %v23
    %v75 = vstv %s71
    %v76 = vadd.f32 %v74, %v75
    %v77 = vmax.f32 %v76, 0.0
    %v78 = vstv %s72
    %v79 = vmul.f32 %v78, %v77
    %v80 = vadd.f32 %v69, %v79
    %s81 = sld [smem:[#allocation2 + $0x5]]
    %s82 = sld [smem:[#allocation2 + $0x25]]
    %s83 = sld [smem:[#allocation2 + $0x45]]
    %v84 = vstv %s81
    %v85 = vmul.f32 %v84, %v23
    %v86 = vstv %s82
    %v87 = vadd.f32 %v85, %v86
    %v88 = vmax.f32 %v87, 0.0
    %v89 = vstv %s83
    %v90 = vmul.f32 %v89, %v88
    %v91 = vadd.f32 %v80, %v90
    %s92 = sld [smem:[#allocation2 + $0x6]]
    %s93 = sld [smem:[#allocation2 + $0x26]]
    %s94 = sld [smem:[#allocation2 + $0x46]]
    %v95 = vstv %s92
    %v96 = vmul.f32 %v95, %v23
    %v97 = vstv %s93
    %v98 = vadd.f32 %v96, %v97
    %v99 = vmax.f32 %v98, 0.0
    %v100 = vstv %s94
    %v101 = vmul.f32 %v100, %v99
    %v102 = vadd.f32 %v91, %v101
    %s103 = sld [smem:[#allocation2 + $0x7]]
    %s104 = sld [smem:[#allocation2 + $0x27]]
    %s105 = sld [smem:[#allocation2 + $0x47]]
    %v106 = vstv %s103
    %v107 = vmul.f32 %v106, %v23
    %v108 = vstv %s104
    %v109 = vadd.f32 %v107, %v108
    %v110 = vmax.f32 %v109, 0.0
    %v111 = vstv %s105
    %v112 = vmul.f32 %v111, %v110
    %v113 = vadd.f32 %v102, %v112
    %s114 = sld [smem:[#allocation2 + $0x8]]
    %s115 = sld [smem:[#allocation2 + $0x28]]
    %s116 = sld [smem:[#allocation2 + $0x48]]
    %v117 = vstv %s114
    %v118 = vmul.f32 %v117, %v23
    %v119 = vstv %s115
    %v120 = vadd.f32 %v118, %v119
    %v121 = vmax.f32 %v120, 0.0
    %v122 = vstv %s116
    %v123 = vmul.f32 %v122, %v121
    %v124 = vadd.f32 %v113, %v123
    %s125 = sld [smem:[#allocation2 + $0x9]]
    %s126 = sld [smem:[#allocation2 + $0x29]]
    %s127 = sld [smem:[#allocation2 + $0x49]]
    %v128 = vstv %s125
    %v129 = vmul.f32 %v128, %v23
    %v130 = vstv %s126
    %v131 = vadd.f32 %v129, %v130
    %v132 = vmax.f32 %v131, 0.0
    %v133 = vstv %s127
    %v134 = vmul.f32 %v133, %v132
    %v135 = vadd.f32 %v124, %v134
    %s136 = sld [smem:[#allocation2 + $0xa]]
    %s137 = sld [smem:[#allocation2 + $0x2a]]
    %s138 = sld [smem:[#allocation2 + $0x4a]]
    %v139 = vstv %s136
    %v140 = vmul.f32 %v139, %v23
    %v141 = vstv %s137
    %v142 = vadd.f32 %v140, %v141
    %v143 = vmax.f32 %v142, 0.0
    %v144 = vstv %s138
    %v145 = vmul.f32 %v144, %v143
    %v146 = vadd.f32 %v135, %v145
    %s147 = sld [smem:[#allocation2 + $0xb]]
    %s148 = sld [smem:[#allocation2 + $0x2b]]
    %s149 = sld [smem:[#allocation2 + $0x4b]]
    %v150 = vstv %s147
    %v151 = vmul.f32 %v150, %v23
    %v152 = vstv %s148
    %v153 = vadd.f32 %v151, %v152
    %v154 = vmax.f32 %v153, 0.0
    %v155 = vstv %s149
    %v156 = vmul.f32 %v155, %v154
    %v157 = vadd.f32 %v146, %v156
    %s158 = sld [smem:[#allocation2 + $0xc]]
    %s159 = sld [smem:[#allocation2 + $0x2c]]
    %s160 = sld [smem:[#allocation2 + $0x4c]]
    %v161 = vstv %s158
    %v162 = vmul.f32 %v161, %v23
    %v163 = vstv %s159
    %v164 = vadd.f32 %v162, %v163
    %v165 = vmax.f32 %v164, 0.0
    %v166 = vstv %s160
    %v167 = vmul.f32 %v166, %v165
    %v168 = vadd.f32 %v157, %v167
    %s169 = sld [smem:[#allocation2 + $0xd]]
    %s170 = sld [smem:[#allocation2 + $0x2d]]
    %s171 = sld [smem:[#allocation2 + $0x4d]]
    %v172 = vstv %s169
    %v173 = vmul.f32 %v172, %v23
    %v174 = vstv %s170
    %v175 = vadd.f32 %v173, %v174
    %v176 = vmax.f32 %v175, 0.0
    %v177 = vstv %s171
    %v178 = vmul.f32 %v177, %v176
    %v179 = vadd.f32 %v168, %v178
    %s180 = sld [smem:[#allocation2 + $0xe]]
    %s181 = sld [smem:[#allocation2 + $0x2e]]
    %s182 = sld [smem:[#allocation2 + $0x4e]]
    %v183 = vstv %s180
    %v184 = vmul.f32 %v183, %v23
    %v185 = vstv %s181
    %v186 = vadd.f32 %v184, %v185
    %v187 = vmax.f32 %v186, 0.0
    %v188 = vstv %s182
    %v189 = vmul.f32 %v188, %v187
    %v190 = vadd.f32 %v179, %v189
    %s191 = sld [smem:[#allocation2 + $0xf]]
    %s192 = sld [smem:[#allocation2 + $0x2f]]
    %s193 = sld [smem:[#allocation2 + $0x4f]]
    %v194 = vstv %s191
    %v195 = vmul.f32 %v194, %v23
    %v196 = vstv %s192
    %v197 = vadd.f32 %v195, %v196
    %v198 = vmax.f32 %v197, 0.0
    %v199 = vstv %s193
    %v200 = vmul.f32 %v199, %v198
    %v201 = vadd.f32 %v190, %v200
    %s202 = sld [smem:[#allocation2 + $0x10]]
    %s203 = sld [smem:[#allocation2 + $0x30]]
    %s204 = sld [smem:[#allocation2 + $0x50]]
    %v205 = vstv %s202
    %v206 = vmul.f32 %v205, %v23
    %v207 = vstv %s203
    %v208 = vadd.f32 %v206, %v207
    %v209 = vmax.f32 %v208, 0.0
    %v210 = vstv %s204
    %v211 = vmul.f32 %v210, %v209
    %v212 = vadd.f32 %v201, %v211
    %s213 = sld [smem:[#allocation2 + $0x11]]
    %s214 = sld [smem:[#allocation2 + $0x31]]
    %s215 = sld [smem:[#allocation2 + $0x51]]
    %v216 = vstv %s213
    %v217 = vmul.f32 %v216, %v23
    %v218 = vstv %s214
    %v219 = vadd.f32 %v217, %v218
    %v220 = vmax.f32 %v219, 0.0
    %v221 = vstv %s215
    %v222 = vmul.f32 %v221, %v220
    %v223 = vadd.f32 %v212, %v222
    %s224 = sld [smem:[#allocation2 + $0x12]]
    %s225 = sld [smem:[#allocation2 + $0x32]]
    %s226 = sld [smem:[#allocation2 + $0x52]]
    %v227 = vstv %s224
    %v228 = vmul.f32 %v227, %v23
    %v229 = vstv %s225
    %v230 = vadd.f32 %v228, %v229
    %v231 = vmax.f32 %v230, 0.0
    %v232 = vstv %s226
    %v233 = vmul.f32 %v232, %v231
    %v234 = vadd.f32 %v223, %v233
    %s235 = sld [smem:[#allocation2 + $0x13]]
    %s236 = sld [smem:[#allocation2 + $0x33]]
    %s237 = sld [smem:[#allocation2 + $0x53]]
    %v238 = vstv %s235
    %v239 = vmul.f32 %v238, %v23
    %v240 = vstv %s236
    %v241 = vadd.f32 %v239, %v240
    %v242 = vmax.f32 %v241, 0.0
    %v243 = vstv %s237
    %v244 = vmul.f32 %v243, %v242
    %v245 = vadd.f32 %v234, %v244
    %s246 = sld [smem:[#allocation2 + $0x14]]
    %s247 = sld [smem:[#allocation2 + $0x34]]
    %s248 = sld [smem:[#allocation2 + $0x54]]
    %v249 = vstv %s246
    %v250 = vmul.f32 %v249, %v23
    %v251 = vstv %s247
    %v252 = vadd.f32 %v250, %v251
    %v253 = vmax.f32 %v252, 0.0
    %v254 = vstv %s248
    %v255 = vmul.f32 %v254, %v253
    %v256 = vadd.f32 %v245, %v255
    %s257 = sld [smem:[#allocation2 + $0x15]]
    %s258 = sld [smem:[#allocation2 + $0x35]]
    %s259 = sld [smem:[#allocation2 + $0x55]]
    %v260 = vstv %s257
    %v261 = vmul.f32 %v260, %v23
    %v262 = vstv %s258
    %v263 = vadd.f32 %v261, %v262
    %v264 = vmax.f32 %v263, 0.0
    %v265 = vstv %s259
    %v266 = vmul.f32 %v265, %v264
    %v267 = vadd.f32 %v256, %v266
    %s268 = sld [smem:[#allocation2 + $0x16]]
    %s269 = sld [smem:[#allocation2 + $0x36]]
    %s270 = sld [smem:[#allocation2 + $0x56]]
    %v271 = vstv %s268
    %v272 = vmul.f32 %v271, %v23
    %v273 = vstv %s269
    %v274 = vadd.f32 %v272, %v273
    %v275 = vmax.f32 %v274, 0.0
    %v276 = vstv %s270
    %v277 = vmul.f32 %v276, %v275
    %v278 = vadd.f32 %v267, %v277
    %s279 = sld [smem:[#allocation2 + $0x17]]
    %s280 = sld [smem:[#allocation2 + $0x37]]
    %s281 = sld [smem:[#allocation2 + $0x57]]
    %v282 = vstv %s279
    %v283 = vmul.f32 %v282, %v23
    %v284 = vstv %s280
    %v285 = vadd.f32 %v283, %v284
    %v286 = vmax.f32 %v285, 0.0
    %v287 = vstv %s281
    %v288 = vmul.f32 %v287, %v286
    %v289 = vadd.f32 %v278, %v288
    %s290 = sld [smem:[#allocation2 + $0x18]]
    %s291 = sld [smem:[#allocation2 + $0x38]]
    %s292 = sld [smem:[#allocation2 + $0x58]]
    %v293 = vstv %s290
    %v294 = vmul.f32 %v293, %v23
    %v295 = vstv %s291
    %v296 = vadd.f32 %v294, %v295
    %v297 = vmax.f32 %v296, 0.0
    %v298 = vstv %s292
    %v299 = vmul.f32 %v298, %v297
    %v300 = vadd.f32 %v289, %v299
    %s301 = sld [smem:[#allocation2 + $0x19]]
    %s302 = sld [smem:[#allocation2 + $0x39]]
    %s303 = sld [smem:[#allocation2 + $0x59]]
    %v304 = vstv %s301
    %v305 = vmul.f32 %v304, %v23
    %v306 = vstv %s302
    %v307 = vadd.f32 %v305, %v306
    %v308 = vmax.f32 %v307, 0.0
    %v309 = vstv %s303
    %v310 = vmul.f32 %v309, %v308
    %v311 = vadd.f32 %v300, %v310
    %s312 = sld [smem:[#allocation2 + $0x1a]]
    %s313 = sld [smem:[#allocation2 + $0x3a]]
    %s314 = sld [smem:[#allocation2 + $0x5a]]
    %v315 = vstv %s312
    %v316 = vmul.f32 %v315, %v23
    %v317 = vstv %s313
    %v318 = vadd.f32 %v316, %v317
    %v319 = vmax.f32 %v318, 0.0
    %v320 = vstv %s314
    %v321 = vmul.f32 %v320, %v319
    %v322 = vadd.f32 %v311, %v321
    %s323 = sld [smem:[#allocation2 + $0x1b]]
    %s324 = sld [smem:[#allocation2 + $0x3b]]
    %s325 = sld [smem:[#allocation2 + $0x5b]]
    %v326 = vstv %s323
    %v327 = vmul.f32 %v326, %v23
    %v328 = vstv %s324
    %v329 = vadd.f32 %v327, %v328
    %v330 = vmax.f32 %v329, 0.0
    %v331 = vstv %s325
    %v332 = vmul.f32 %v331, %v330
    %v333 = vadd.f32 %v322, %v332
    %s334 = sld [smem:[#allocation2 + $0x1c]]
    %s335 = sld [smem:[#allocation2 + $0x3c]]
    %s336 = sld [smem:[#allocation2 + $0x5c]]
    %v337 = vstv %s334
    %v338 = vmul.f32 %v337, %v23
    %v339 = vstv %s335
    %v340 = vadd.f32 %v338, %v339
    %v341 = vmax.f32 %v340, 0.0
    %v342 = vstv %s336
    %v343 = vmul.f32 %v342, %v341
    %v344 = vadd.f32 %v333, %v343
    %s345 = sld [smem:[#allocation2 + $0x1d]]
    %s346 = sld [smem:[#allocation2 + $0x3d]]
    %s347 = sld [smem:[#allocation2 + $0x5d]]
    %v348 = vstv %s345
    %v349 = vmul.f32 %v348, %v23
    %v350 = vstv %s346
    %v351 = vadd.f32 %v349, %v350
    %v352 = vmax.f32 %v351, 0.0
    %v353 = vstv %s347
    %v354 = vmul.f32 %v353, %v352
    %v355 = vadd.f32 %v344, %v354
    %s356 = sld [smem:[#allocation2 + $0x1e]]
    %s357 = sld [smem:[#allocation2 + $0x3e]]
    %s358 = sld [smem:[#allocation2 + $0x5e]]
    %v359 = vstv %s356
    %v360 = vmul.f32 %v359, %v23
    %v361 = vstv %s357
    %v362 = vadd.f32 %v360, %v361
    %v363 = vmax.f32 %v362, 0.0
    %v364 = vstv %s358
    %v365 = vmul.f32 %v364, %v363
    %v366 = vadd.f32 %v355, %v365
    %s367 = sld [smem:[#allocation2 + $0x1f]]
    %s368 = sld [smem:[#allocation2 + $0x3f]]
    %s369 = sld [smem:[#allocation2 + $0x5f]]
    %v370 = vstv %s367
    %v371 = vmul.f32 %v370, %v23
    %v372 = vstv %s368
    %v373 = vadd.f32 %v371, %v372
    %v374 = vmax.f32 %v373, 0.0
    %v375 = vstv %s369
    %v376 = vmul.f32 %v375, %v374
    %v377 = vadd.f32 %v366, %v376
    %378 = vst [vmem:[#allocation5] sm:$0x1] %v377
    // Predicated region
    $region14: #{tpu_custom_call.1} parent=1 // pred_check
      _
    $region15: #{tpu_custom_call.1} parent=1 // pred_check_branch
      %380 = sbr.rel (0) target = $region17
    $region16: #{tpu_custom_call.1} parent=1 // pred_region
      %s382 = ssub.s32 16, 16
      %383 = vsyncadd [#allocation3], %s382
      %s385 = sshll.u32 [#allocation5], 4
      %s386 = int_to_ptr.vmem [resolvable:$true] %s385
      %388 = dma.vmem_to_hbm [thread:$0]  %s386, 16, %s2, [#allocation3]
    $region17: #{tpu_custom_call.1} parent=1 // pred_fallthru
      _
    // Predicated region
    $region18: #{tpu_custom_call.1} parent=1 // pred_check
      _
    $region19: #{tpu_custom_call.1} parent=1 // pred_check_branch
      %390 = sbr.rel (0) target = $region21
    $region20: #{tpu_custom_call.1} parent=1 // pred_region
      %391 = dma.done [#allocation3], 16
    $region21: #{tpu_custom_call.1} parent=1 // pred_fallthru
      _
    %392 = vsyncpa [#allocation3], 1
    %393 = vsyncpa [#allocation4], 1

</llo_original>
